<compile_context>
chip_gen: v5e
topology: v5e:2x2
jax: 0.10.0
libtpu: 0.0.40
codegen_flags: <defaults>
</compile_context>

<pallas_src>
import functools

import numpy as np
import jax
import jax.numpy as jnp
from jax.experimental import pallas as pl
from jax.experimental.pallas import tpu as pltpu

LN_EPS = 1e-5  # nn.LayerNorm default


def _layernorm(t, gamma, beta, eps):
    # centered variance (two-pass style) - avoids E[x^2] - mu^2 cancellation
    mu = jnp.mean(t, axis=-1, keepdims=True)
    c = t - mu
    var = jnp.mean(c * c, axis=-1, keepdims=True)
    return c * jax.lax.rsqrt(var + eps) * gamma + beta


# --------------------------------------------------------------------------
# K/V projection kernel:  (optional LayerNorm) -> fused Wk/Wv matmul
# emits K^T, V^T as (B, heads, d_head, M) bf16  (lane-dense in M).
# Runs once per context token (not once per q tile).
# --------------------------------------------------------------------------
def kv_proj_kernel(ctx_ref, g_ref, b_ref, wkvT_ref, kT_ref, vT_ref, *,
                   heads, d_head, norm, eps):
    inner = heads * d_head
    c = ctx_ref[0]                                                   # (bm, Dc)
    if norm:
        cn = _layernorm(c.astype(jnp.float32), g_ref[...], b_ref[...], eps)
        cb = cn.astype(jnp.bfloat16)
    else:
        cb = c.astype(jnp.bfloat16)          # cross-attn: no f32 round trip
    # kvT[r, j] = sum_c wkvT[r, c] * ctx_n[j, c]   (contracts over Dc, NT form)
    kvT = jax.lax.dot_general(wkvT_ref[...], cb, (((1,), (1,)), ((), ())),
                              preferred_element_type=jnp.float32)    # (2I, bm)
    kvT = kvT.astype(jnp.bfloat16)
    bm = c.shape[0]
    kT_ref[0] = kvT[:inner].reshape(heads, d_head, bm)
    vT_ref[0] = kvT[inner:].reshape(heads, d_head, bm)


def kv_projection(ctx, gamma, beta, wkvT, *, heads, d_head, norm,
                  block_m=256, vmem_limit=48 * 1024 * 1024):
    B, M, Dc = ctx.shape
    inner = heads * d_head
    bm = min(block_m, M)
    assert M % bm == 0
    assert bm % 128 == 0 or bm == M, "kv seq tile must be lane-dense or full"
    assert wkvT.shape == (2 * inner, Dc)

    kernel = functools.partial(kv_proj_kernel, heads=heads, d_head=d_head,
                               norm=norm, eps=LN_EPS)
    cost = pl.CostEstimate(
        flops=int(4 * B * M * Dc * inner),
        transcendentals=int(B * M if norm else 0),
        bytes_accessed=int(B * M * Dc * ctx.dtype.itemsize
                           + 2 * B * inner * M * 2 + 2 * inner * Dc * 2
                           + 2 * Dc * 4))
    return pl.pallas_call(
        kernel,
        out_shape=(jax.ShapeDtypeStruct((B, heads, d_head, M), jnp.bfloat16),
                   jax.ShapeDtypeStruct((B, heads, d_head, M), jnp.bfloat16)),
        grid_spec=pltpu.PrefetchScalarGridSpec(
            num_scalar_prefetch=0,
            grid=(B, M // bm),
            in_specs=[
                pl.BlockSpec((1, bm, Dc), lambda b, m: (b, m, 0)),        # ctx
                pl.BlockSpec((1, Dc), lambda b, m: (0, 0)),               # ln gamma
                pl.BlockSpec((1, Dc), lambda b, m: (0, 0)),               # ln beta
                pl.BlockSpec((2 * inner, Dc), lambda b, m: (0, 0)),       # fused WkWv
            ],
            out_specs=[
                pl.BlockSpec((1, heads, d_head, bm), lambda b, m: (b, 0, 0, m)),
                pl.BlockSpec((1, heads, d_head, bm), lambda b, m: (b, 0, 0, m)),
            ],
        ),
        compiler_params=pltpu.CompilerParams(
            dimension_semantics=("parallel", "parallel"),
            vmem_limit_bytes=vmem_limit,
        ),
        cost_estimate=cost,
    )(ctx, gamma, beta, wkvT)


# --------------------------------------------------------------------------
# Fused  LayerNorm -> q proj -> flash attention -> out proj -> residual
# (K/V are precomputed head-major transposed tiles from kv_projection).
# --------------------------------------------------------------------------
def attn_kernel(x_ref, kT_ref, vT_ref, g_ref, b_ref, wq_ref, wo_ref, bo_ref,
                o_ref, q_scr, m_scr, l_scr, acc_scr, *, heads, d_head, eps):
    kv_i = pl.program_id(2)

    # ---- first kv step for this (batch, q_tile): LN + q projection ----
    @pl.when(kv_i == 0)
    def _():
        xn = _layernorm(x_ref[0].astype(jnp.float32), g_ref[...], b_ref[...], eps)
        # 1/sqrt(d_head) attention scale is folded into wq host-side
        q = jnp.dot(xn.astype(jnp.bfloat16), wq_ref[...],
                    preferred_element_type=jnp.float32)              # (bq, I)
        qb = q.astype(jnp.bfloat16)
        for h in range(heads):                   # head-major scratch (init only)
            q_scr[h] = qb[:, h * d_head:(h + 1) * d_head]
        m_scr[...] = jnp.full(m_scr.shape, -jnp.inf, dtype=m_scr.dtype)
        l_scr[...] = jnp.zeros(l_scr.shape, dtype=l_scr.dtype)
        acc_scr[...] = jnp.zeros(acc_scr.shape, dtype=acc_scr.dtype)

    # ---- online softmax, all heads batched in single MXU / EUP calls ----
    q = q_scr[...]                                                   # (h, bq, dh) bf16
    kT = kT_ref[0]                                                   # (h, dh, bk) bf16
    vT = vT_ref[0]                                                   # (h, dh, bk) bf16
    s = jnp.einsum('hqd,hdk->hqk', q, kT,
                   preferred_element_type=jnp.float32)               # (h, bq, bk)
    m_prev = m_scr[...]
    m_new = jnp.maximum(m_prev, jnp.max(s, axis=-1, keepdims=True))
    alpha = jnp.exp(m_prev - m_new)
    p = jnp.exp(s - m_new)
    l_scr[...] = alpha * l_scr[...] + jnp.sum(p, axis=-1, keepdims=True)
    pv = jnp.einsum('hqk,hdk->hqd', p.astype(jnp.bfloat16), vT,
                    preferred_element_type=jnp.float32)              # (h, bq, dh)
    acc_scr[...] = alpha * acc_scr[...] + pv
    m_scr[...] = m_new

    # ---- last kv step: normalize, out-projection, residual, store ----
    @pl.when(kv_i == pl.num_programs(2) - 1)
    def _():
        o = (acc_scr[...] * pl.reciprocal(l_scr[...], approx=True)
             ).astype(jnp.bfloat16)                                  # (h, bq, dh)
        y = None
        for h in range(heads):                    # finalize-only per-head matmuls
            c = jnp.dot(o[h], wo_ref[h * d_head:(h + 1) * d_head, :],
                        preferred_element_type=jnp.float32)
            y = c if y is None else y + c
        o_ref[0] = (x_ref[0].astype(jnp.float32) + y + bo_ref[...]
                    ).astype(o_ref.dtype)


def attention_block(x, kT, vT, gamma, beta, wq, wo, bo, *, heads, d_head,
                    block_q=256, block_k=256, out_dtype=jnp.bfloat16,
                    vmem_limit=48 * 1024 * 1024):
    B, N, D = x.shape
    inner = heads * d_head
    M = kT.shape[-1]
    assert kT.shape == (B, heads, d_head, M) and vT.shape == kT.shape
    assert wq.shape == (D, inner) and wo.shape == (inner, D)
    bq = min(block_q, N)
    bk = min(block_k, M)
    assert N % bq == 0 and M % bk == 0
    assert bk % 128 == 0 or bk == M, "kv tile must be lane-dense (x128) or full"

    kernel = functools.partial(attn_kernel, heads=heads, d_head=d_head, eps=LN_EPS)
    cost = pl.CostEstimate(
        flops=int(2 * B * N * D * inner + 4 * B * N * M * inner
                  + 2 * B * N * inner * D),
        transcendentals=int(B * heads * N * M),
        bytes_accessed=int(B * N * D * x.dtype.itemsize
                           + (N // bq) * B * 2 * inner * M * 2
                           + B * N * D * np.dtype(out_dtype).itemsize
                           + 2 * D * inner * 2 + 3 * D * 4))
    return pl.pallas_call(
        kernel,
        out_shape=jax.ShapeDtypeStruct((B, N, D), out_dtype),
        grid_spec=pltpu.PrefetchScalarGridSpec(
            num_scalar_prefetch=0,
            grid=(B, N // bq, M // bk),     # keep B*(N//bq) >= 2 for v7x dual-TC
            in_specs=[
                pl.BlockSpec((1, bq, D), lambda b, qi, ki: (b, qi, 0)),     # x
                pl.BlockSpec((1, heads, d_head, bk),
                             lambda b, qi, ki: (b, 0, 0, ki)),              # K^T
                pl.BlockSpec((1, heads, d_head, bk),
                             lambda b, qi, ki: (b, 0, 0, ki)),              # V^T
                pl.BlockSpec((1, D), lambda b, qi, ki: (0, 0)),             # ln gamma
                pl.BlockSpec((1, D), lambda b, qi, ki: (0, 0)),             # ln beta
                pl.BlockSpec((D, inner), lambda b, qi, ki: (0, 0)),         # wq (scaled)
                pl.BlockSpec((inner, D), lambda b, qi, ki: (0, 0)),         # wo
                pl.BlockSpec((1, D), lambda b, qi, ki: (0, 0)),             # bo
            ],
            out_specs=pl.BlockSpec((1, bq, D), lambda b, qi, ki: (b, qi, 0)),
            scratch_shapes=[
                pltpu.VMEM((heads, bq, d_head), jnp.bfloat16),   # q (head-major)
                pltpu.VMEM((heads, bq, 1), jnp.float32),         # running max
                pltpu.VMEM((heads, bq, 1), jnp.float32),         # running sum
                pltpu.VMEM((heads, bq, d_head), jnp.float32),    # accumulator
            ],
        ),
        compiler_params=pltpu.CompilerParams(
            dimension_semantics=("parallel", "parallel", "arbitrary"),
            vmem_limit_bytes=vmem_limit,
        ),
        cost_estimate=cost,
    )(x, kT, vT, gamma, beta, wq, wo, bo)


# --------------------------------------------------------------------------
# Fused  LayerNorm -> GEGLU FeedForward -> residual, tiled over hidden dim F
# --------------------------------------------------------------------------
def ff_kernel(x_ref, g_ref, b_ref, w1v_ref, w1g_ref, b1v_ref, b1g_ref,
              w2_ref, b2_ref, o_ref, xn_scr, acc_scr, *, eps):
    fi = pl.program_id(2)

    @pl.when(fi == 0)
    def _():
        xn = _layernorm(x_ref[0].astype(jnp.float32), g_ref[...], b_ref[...], eps)
        xn_scr[...] = xn.astype(jnp.bfloat16)
        acc_scr[...] = jnp.zeros(acc_scr.shape, dtype=acc_scr.dtype)

    xn = xn_scr[...]                                                 # (bn, D) bf16
    hv = jnp.dot(xn, w1v_ref[...], preferred_element_type=jnp.float32) + b1v_ref[...]
    hg = jnp.dot(xn, w1g_ref[...], preferred_element_type=jnp.float32) + b1g_ref[...]
    # TODO(synk): PyTorch F.gelu is erf-exact; Mosaic has no erf lowering, so the
    # tanh approximation is used (max abs deviation ~1e-3).
    c0 = 0.7978845608028654  # sqrt(2/pi)
    gelu_g = 0.5 * hg * (1.0 + jnp.tanh(c0 * (hg + 0.044715 * hg * hg * hg)))
    act = (hv * gelu_g).astype(jnp.bfloat16)                         # (bn, bf)
    acc_scr[...] += jnp.dot(act, w2_ref[...], preferred_element_type=jnp.float32)

    @pl.when(fi == pl.num_programs(2) - 1)
    def _():
        o_ref[0] = (x_ref[0].astype(jnp.float32) + acc_scr[...] + b2_ref[...]
                    ).astype(o_ref.dtype)


def feedforward_block(x, gamma, beta, w1_val, w1_gate, b1_val, b1_gate, w2, b2,
                      *, block_n=256, block_f=1024, out_dtype=None,
                      vmem_limit=48 * 1024 * 1024):
    B, N, D = x.shape
    F = w1_val.shape[1]
    assert w1_val.shape == (D, F) and w1_gate.shape == (D, F) and w2.shape == (F, D)
    bn = min(block_n, N)
    bf = min(block_f, F)
    assert N % bn == 0 and F % bf == 0
    assert bf % 128 == 0 or bf == F
    out_dtype = x.dtype if out_dtype is None else out_dtype

    kernel = functools.partial(ff_kernel, eps=LN_EPS)
    cost = pl.CostEstimate(
        flops=int(6 * B * N * D * F),
        transcendentals=int(B * N * F),
        bytes_accessed=int(B * N * D * x.dtype.itemsize
                           + B * N * D * np.dtype(out_dtype).itemsize
                           + 3 * D * F * 2 + (2 * F + 3 * D) * 4))
    return pl.pallas_call(
        kernel,
        out_shape=jax.ShapeDtypeStruct((B, N, D), out_dtype),
        grid_spec=pltpu.PrefetchScalarGridSpec(
            num_scalar_prefetch=0,
            grid=(B, N // bn, F // bf),
            in_specs=[
                pl.BlockSpec((1, bn, D), lambda b, i, f: (b, i, 0)),   # x
                pl.BlockSpec((1, D), lambda b, i, f: (0, 0)),          # ln gamma
                pl.BlockSpec((1, D), lambda b, i, f: (0, 0)),          # ln beta
                pl.BlockSpec((D, bf), lambda b, i, f: (0, f)),         # w1 value half
                pl.BlockSpec((D, bf), lambda b, i, f: (0, f)),         # w1 gate half
                pl.BlockSpec((1, bf), lambda b, i, f: (0, f)),         # b1 value
                pl.BlockSpec((1, bf), lambda b, i, f: (0, f)),         # b1 gate
                pl.BlockSpec((bf, D), lambda b, i, f: (f, 0)),         # w2
                pl.BlockSpec((1, D), lambda b, i, f: (0, 0)),          # b2
            ],
            out_specs=pl.BlockSpec((1, bn, D), lambda b, i, f: (b, i, 0)),
            scratch_shapes=[
                pltpu.VMEM((bn, D), jnp.bfloat16),    # cached LN(x)
                pltpu.VMEM((bn, D), jnp.float32),     # w2 accumulator
            ],
        ),
        compiler_params=pltpu.CompilerParams(
            dimension_semantics=("parallel", "parallel", "arbitrary"),
            vmem_limit_bytes=vmem_limit,
        ),
        cost_estimate=cost,
    )(x, gamma, beta, w1_val, w1_gate, b1_val, b1_gate, w2, b2)


# --------------------------------------------------------------------------
# TransformerBlock forward (host-side weight prep + the fused kernels)
# --------------------------------------------------------------------------
def transformer_block(x, context, p, *, heads, d_head,
                      block_q=256, block_k=256, block_m=256,
                      block_n=256, block_f=1024):
    dim = x.shape[-1]
    inner = heads * d_head
    scale = float(d_head) ** (-0.5)
    orig_dtype = x.dtype

    def ln_params(name, d):
        return (p[f"{name}_g"].reshape(1, d).astype(jnp.float32),
                p[f"{name}_b"].reshape(1, d).astype(jnp.float32))

    g1, be1 = ln_params("ln1", dim)
    g2, be2 = ln_params("ln2", dim)
    g3, be3 = ln_params("ln3", dim)

    def attn(x_in, kv_src, prefix, ln_g, ln_b, norm_kv):
        dc = kv_src.shape[-1]
        # nn.Linear weight is (out, in).  Fold attention scale into Wq; fuse
        # Wk/Wv rows (no transpose needed for the NT projection); bf16 MXU weights.
        wq = (p[f"{prefix}_wq"].T * scale).astype(jnp.bfloat16)           # (D, I)
        wkvT = jnp.concatenate([p[f"{prefix}_wk"], p[f"{prefix}_wv"]],
                               axis=0).astype(jnp.bfloat16)               # (2I, Dc)
        wo = p[f"{prefix}_wo"].T.astype(jnp.bfloat16)                     # (I, D)
        bo = p[f"{prefix}_bo"].reshape(1, dim).astype(jnp.float32)
        if norm_kv:
            kg, kb = ln_g, ln_b
        else:  # LN branch not traced when norm_kv=False; dummies are never read
            kg = jnp.ones((1, dc), jnp.float32)
            kb = jnp.zeros((1, dc), jnp.float32)
        kT, vT = kv_projection(kv_src, kg, kb, wkvT, heads=heads, d_head=d_head,
                               norm=norm_kv, block_m=block_m)
        return attention_block(x_in, kT, vT, ln_g, ln_b, wq, wo, bo,
                               heads=heads, d_head=d_head,
                               block_q=block_q, block_k=block_k,
                               out_dtype=jnp.bfloat16)

    # attn1: self-attention over norm1(x)
    x = attn(x, x, "attn1", g1, be1, True)

    # attn2: cross-attention (k/v from raw context, or from norm2(x) if None)
    if context is None:
        x = attn(x, x, "attn2", g2, be2, True)
    else:
        x = attn(x, context, "attn2", g2, be2, False)

    # feed-forward (GEGLU, gatted_ff=True) — w1 split into value / gate halves
    ff_inner = p["ff_w2"].shape[1]
    w1 = p["ff_w1"]                                               # (2F, D)
    w1_val = w1[:ff_inner].T.astype(jnp.bfloat16)                 # (D, F)
    w1_gate = w1[ff_inner:].T.astype(jnp.bfloat16)                # (D, F)
    b1_val = p["ff_b1"][:ff_inner].reshape(1, ff_inner).astype(jnp.float32)
    b1_gate = p["ff_b1"][ff_inner:].reshape(1, ff_inner).astype(jnp.float32)
    w2 = p["ff_w2"].T.astype(jnp.bfloat16)                        # (F, D)
    b2 = p["ff_b2"].reshape(1, dim).astype(jnp.float32)
    x = feedforward_block(x, g3, be3, w1_val, w1_gate, b1_val, b1_gate, w2, b2,
                          block_n=block_n, block_f=block_f, out_dtype=orig_dtype)
    return x


# --------------------------------------------------------------------------
# Pure-JAX f32 replica of the PyTorch forward (correctness check)
# --------------------------------------------------------------------------
def reference(x, context, p, heads, d_head):
    def ln(t, g, b):
        mu = t.mean(-1, keepdims=True)
        var = ((t - mu) ** 2).mean(-1, keepdims=True)
        return (t - mu) / jnp.sqrt(var + LN_EPS) * g + b

    def mha(xq, ctx, wq, wk, wv, wo, bo):
        q = xq @ wq.T
        k = ctx @ wk.T
        v = ctx @ wv.T
        B, N, _ = q.shape
        M = k.shape[1]
        q = q.reshape(B, N, heads, d_head).transpose(0, 2, 1, 3)
        k = k.reshape(B, M, heads, d_head).transpose(0, 2, 1, 3)
        v = v.reshape(B, M, heads, d_head).transpose(0, 2, 1, 3)
        s = jnp.einsum("bhid,bhjd->bhij", q, k) * (float(d_head) ** (-0.5))
        a = jax.nn.softmax(s, axis=-1)
        o = jnp.einsum("bhij,bhjd->bhid", a, v)
        o = o.transpose(0, 2, 1, 3).reshape(B, N, heads * d_head)
        return o @ wo.T + bo

    h1 = ln(x, p["ln1_g"], p["ln1_b"])
    x = x + mha(h1, h1, p["attn1_wq"], p["attn1_wk"], p["attn1_wv"],
                p["attn1_wo"], p["attn1_bo"])
    h2 = ln(x, p["ln2_g"], p["ln2_b"])
    ctx = h2 if context is None else context
    x = x + mha(h2, ctx, p["attn2_wq"], p["attn2_wk"], p["attn2_wv"],
                p["attn2_wo"], p["attn2_bo"])
    h3 = ln(x, p["ln3_g"], p["ln3_b"])
    hf = h3 @ p["ff_w1"].T + p["ff_b1"]
    f = hf.shape[-1] // 2
    val, gate = hf[..., :f], hf[..., f:]
    x = x + (val * jax.nn.gelu(gate, approximate=False)) @ p["ff_w2"].T + p["ff_b2"]
    return x


if __name__ == "__main__":
    B, N, DIM = 2, 256, 128
    HEADS, D_HEAD = 4, 32          # inner_dim = 128 == DIM
    CTX_N, CTX_DIM = 256, 64
    INNER = HEADS * D_HEAD
    FF_INNER = 4 * DIM             # 512

    key = jax.random.PRNGKey(0)
    ks = jax.random.split(key, 24)
    _k = iter(range(24))
    nxt = lambda: ks[next(_k)]
    w = lambda shape, s=0.05: s * jax.random.normal(nxt(), shape, jnp.float32)

    params = {
        "ln1_g": 1.0 + 0.1 * jax.random.normal(nxt(), (DIM,), jnp.float32),
        "ln1_b": 0.1 * jax.random.normal(nxt(), (DIM,), jnp.float32),
        "ln2_g": 1.0 + 0.1 * jax.random.normal(nxt(), (DIM,), jnp.float32),
        "ln2_b": 0.1 * jax.random.normal(nxt(), (DIM,), jnp.float32),
        "ln3_g": 1.0 + 0.1 * jax.random.normal(nxt(), (DIM,), jnp.float32),
        "ln3_b": 0.1 * jax.random.normal(nxt(), (DIM,), jnp.float32),
        "attn1_wq": w((INNER, DIM)),
        "attn1_wk": w((INNER, DIM)),
        "attn1_wv": w((INNER, DIM)),
        "attn1_wo": w((DIM, INNER)),
        "attn1_bo": w((DIM,)),
        "attn2_wq": w((INNER, DIM)),
        "attn2_wk": w((INNER, CTX_DIM)),
        "attn2_wv": w((INNER, CTX_DIM)),
        "attn2_wo": w((DIM, INNER)),
        "attn2_bo": w((DIM,)),
        "ff_w1": w((2 * FF_INNER, DIM)),
        "ff_b1": w((2 * FF_INNER,)),
        "ff_w2": w((DIM, FF_INNER)),
        "ff_b2": w((DIM,)),
    }
    x = jax.random.normal(nxt(), (B, N, DIM), jnp.float32)
    context = jax.random.normal(nxt(), (B, CTX_N, CTX_DIM), jnp.float32)

    # tiles chosen so the kv loop, the q-tile reuse of cached K/V, and the
    # FF hidden-dim accumulation all really iterate
    y = transformer_block(x, context, params, heads=HEADS, d_head=D_HEAD,
                          block_q=128, block_k=128, block_m=128,
                          block_n=128, block_f=256)
    y = jax.block_until_ready(y)

    y_ref = jax.block_until_ready(reference(x, context, params, HEADS, D_HEAD))
    assert y.shape == (B, N, DIM)
    max_diff = float(jnp.max(jnp.abs(y - y_ref)))
    assert jnp.allclose(y, y_ref, atol=3e-2, rtol=3e-2), f"max abs diff {max_diff}"
    print("KERNEL_OK")
</pallas_src>

<mosaic_0001>
module attributes {stable_mosaic.version = 11 : i64} {
  func.func @kv_proj_kernel(%arg0: i32, %arg1: i32, %arg2: memref<1x128x128xf32, #tpu.memory_space<vmem>>, %arg3: memref<1x128xf32, #tpu.memory_space<vmem>>, %arg4: memref<1x128xf32, #tpu.memory_space<vmem>>, %arg5: memref<256x128xbf16, #tpu.memory_space<vmem>>, %arg6: memref<1x4x32x128xbf16, #tpu.memory_space<vmem>>, %arg7: memref<1x4x32x128xbf16, #tpu.memory_space<vmem>>) attributes {dimension_semantics = [#tpu.dimension_semantics<parallel>, #tpu.dimension_semantics<parallel>], iteration_bounds = array<i64: 2, 2>, scalar_prefetch = 0 : i64, scratch_operands = 0 : i64, tpu.core_type = #tpu.core_type<tc>, window_params = [{transform_indices = @transform_0, window_bounds = array<i64: 1, 128, 128>}, {pipeline_mode = #tpu.pipeline_mode<synchronous>, transform_indices = @transform_1, window_bounds = array<i64: 1, 128>}, {pipeline_mode = #tpu.pipeline_mode<synchronous>, transform_indices = @transform_2, window_bounds = array<i64: 1, 128>}, {pipeline_mode = #tpu.pipeline_mode<synchronous>, transform_indices = @transform_3, window_bounds = array<i64: 256, 128>}, {transform_indices = @transform_4, window_bounds = array<i64: 1, 4, 32, 128>}, {transform_indices = @transform_5, window_bounds = array<i64: 1, 4, 32, 128>}]} {
    %c0 = arith.constant 0 : index
    %c0_0 = arith.constant 0 : index
    %c0_1 = arith.constant 0 : index
    %0 = vector.load %arg2[%c0, %c0_0, %c0_1] : memref<1x128x128xf32, #tpu.memory_space<vmem>>, vector<1x128x128xf32>
    %1 = vector.shape_cast %0 : vector<1x128x128xf32> to vector<128x128xf32>
    %c0_2 = arith.constant 0 : index
    %c0_3 = arith.constant 0 : index
    %2 = vector.load %arg3[%c0_2, %c0_3] : memref<1x128xf32, #tpu.memory_space<vmem>>, vector<1x128xf32>
    %c0_4 = arith.constant 0 : index
    %c0_5 = arith.constant 0 : index
    %3 = vector.load %arg4[%c0_4, %c0_5] : memref<1x128xf32, #tpu.memory_space<vmem>>, vector<1x128xf32>
    %cst = arith.constant dense<0.000000e+00> : vector<128xf32>
    %4 = vector.multi_reduction <add>, %1, %cst [1] : vector<128x128xf32> to vector<128xf32>
    %5 = vector.shape_cast %4 : vector<128xf32> to vector<128x1xf32>
    %cst_6 = arith.constant 1.280000e+02 : f32
    %6 = vector.broadcast %cst_6 : f32 to vector<128x1xf32>
    %7 = arith.divf %5, %6 : vector<128x1xf32>
    %8 = vector.broadcast %7 : vector<128x1xf32> to vector<128x128xf32>
    %9 = arith.subf %1, %8 : vector<128x128xf32>
    %10 = arith.mulf %9, %9 : vector<128x128xf32>
    %cst_7 = arith.constant dense<0.000000e+00> : vector<128xf32>
    %11 = vector.multi_reduction <add>, %10, %cst_7 [1] : vector<128x128xf32> to vector<128xf32>
    %12 = vector.shape_cast %11 : vector<128xf32> to vector<128x1xf32>
    %cst_8 = arith.constant 1.280000e+02 : f32
    %13 = vector.broadcast %cst_8 : f32 to vector<128x1xf32>
    %14 = arith.divf %12, %13 : vector<128x1xf32>
    %cst_9 = arith.constant 9.99999974E-6 : f32
    %15 = vector.broadcast %cst_9 : f32 to vector<128x1xf32>
    %16 = arith.addf %14, %15 : vector<128x1xf32>
    %17 = math.rsqrt %16 : vector<128x1xf32>
    %18 = vector.broadcast %17 : vector<128x1xf32> to vector<128x128xf32>
    %19 = arith.mulf %9, %18 : vector<128x128xf32>
    %20 = vector.broadcast %2 : vector<1x128xf32> to vector<128x128xf32>
    %21 = arith.mulf %19, %20 : vector<128x128xf32>
    %22 = vector.broadcast %3 : vector<1x128xf32> to vector<128x128xf32>
    %23 = arith.addf %21, %22 : vector<128x128xf32>
    %24 = arith.truncf %23 : vector<128x128xf32> to vector<128x128xbf16>
    %c0_10 = arith.constant 0 : index
    %c0_11 = arith.constant 0 : index
    %25 = vector.load %arg5[%c0_10, %c0_11] : memref<256x128xbf16, #tpu.memory_space<vmem>>, vector<256x128xbf16>
    %cst_12 = arith.constant dense<0.000000e+00> : vector<256x128xf32>
    %26 = tpu.matmul %25, %24, %cst_12 {dimension_numbers = #tpu.dot_dimension_numbers<[1], [1], [0], [0], [0, 0, 1, 0], [], []>} : vector<256x128xbf16>, vector<128x128xbf16>, vector<256x128xf32> -> vector<256x128xf32>
    %27 = arith.truncf %26 : vector<256x128xf32> to vector<256x128xbf16>
    %28 = vector.extract_strided_slice %27 {offsets = [0, 0], sizes = [128, 128], strides = [1, 1]} : vector<256x128xbf16> to vector<128x128xbf16>
    %29 = vector.shape_cast %28 : vector<128x128xbf16> to vector<4x32x128xbf16>
    %c0_13 = arith.constant 0 : index
    %c0_14 = arith.constant 0 : index
    %c0_15 = arith.constant 0 : index
    %c0_16 = arith.constant 0 : index
    %30 = vector.load %arg6[%c0_13, %c0_14, %c0_15, %c0_16] : memref<1x4x32x128xbf16, #tpu.memory_space<vmem>>, vector<1x4x32x128xbf16>
    %31 = vector.shape_cast %30 : vector<1x4x32x128xbf16> to vector<4x32x128xbf16>
    %32 = vector.shape_cast %29 : vector<4x32x128xbf16> to vector<1x4x32x128xbf16>
    tpu.vector_store %arg6[%c0_13, %c0_14, %c0_15, %c0_16], %32 {strides = array<i32>} : memref<1x4x32x128xbf16, #tpu.memory_space<vmem>>, vector<1x4x32x128xbf16>,
    %33 = vector.extract_strided_slice %27 {offsets = [128, 0], sizes = [128, 128], strides = [1, 1]} : vector<256x128xbf16> to vector<128x128xbf16>
    %34 = vector.shape_cast %33 : vector<128x128xbf16> to vector<4x32x128xbf16>
    %c0_17 = arith.constant 0 : index
    %c0_18 = arith.constant 0 : index
    %c0_19 = arith.constant 0 : index
    %c0_20 = arith.constant 0 : index
    %35 = vector.load %arg7[%c0_17, %c0_18, %c0_19, %c0_20] : memref<1x4x32x128xbf16, #tpu.memory_space<vmem>>, vector<1x4x32x128xbf16>
    %36 = vector.shape_cast %35 : vector<1x4x32x128xbf16> to vector<4x32x128xbf16>
    %37 = vector.shape_cast %34 : vector<4x32x128xbf16> to vector<1x4x32x128xbf16>
    tpu.vector_store %arg7[%c0_17, %c0_18, %c0_19, %c0_20], %37 {strides = array<i32>} : memref<1x4x32x128xbf16, #tpu.memory_space<vmem>>, vector<1x4x32x128xbf16>,
    return
  }
  func.func @transform_0(%arg0: i32, %arg1: i32) -> (i32, i32, i32) {
    %c0_i32 = arith.constant 0 : i32
    %c0_i32_0 = arith.constant 0 : i32
    return %arg0, %arg1, %c0_i32 : i32, i32, i32
  }
  func.func @transform_1(%arg0: i32, %arg1: i32) -> (i32, i32) {
    %c0_i32 = arith.constant 0 : i32
    %c0_i32_0 = arith.constant 0 : i32
    %c0_i32_1 = arith.constant 0 : i32
    return %c0_i32, %c0_i32_0 : i32, i32
  }
  func.func @transform_2(%arg0: i32, %arg1: i32) -> (i32, i32) {
    %c0_i32 = arith.constant 0 : i32
    %c0_i32_0 = arith.constant 0 : i32
    %c0_i32_1 = arith.constant 0 : i32
    return %c0_i32, %c0_i32_0 : i32, i32
  }
  func.func @transform_3(%arg0: i32, %arg1: i32) -> (i32, i32) {
    %c0_i32 = arith.constant 0 : i32
    %c0_i32_0 = arith.constant 0 : i32
    %c0_i32_1 = arith.constant 0 : i32
    return %c0_i32, %c0_i32_0 : i32, i32
  }
  func.func @transform_4(%arg0: i32, %arg1: i32) -> (i32, i32, i32, i32) {
    %c0_i32 = arith.constant 0 : i32
    %c0_i32_0 = arith.constant 0 : i32
    %c0_i32_1 = arith.constant 0 : i32
    return %arg0, %c0_i32, %c0_i32_0, %arg1 : i32, i32, i32, i32
  }
  func.func @transform_5(%arg0: i32, %arg1: i32) -> (i32, i32, i32, i32) {
    %c0_i32 = arith.constant 0 : i32
    %c0_i32_0 = arith.constant 0 : i32
    %c0_i32_1 = arith.constant 0 : i32
    return %arg0, %c0_i32, %c0_i32_0, %arg1 : i32, i32, i32, i32
  }
}

</mosaic_0001>

<llo_original>
// kernel: tpu_custom_call.1
$region0: #{tpu_custom_call.1}
  #allocation0 [shape = 'u32[]', space=smem, size = 0x4, offset = 0x4, fixed_abs, tag = 'smem constant byte address 0x4 - core index']
  #allocation1 [shape = 'u32[72,128]{1,0:T(1,128)}', space=vmem, size = 0x9000, scoped, tag = 'internal scratch']
  %s0 = inlined_call_operand.hbm [shape: f32[2,256,128], index: 0, kind: input, shape index: {}]
  %s1 = inlined_call_operand.hbm [shape: f32[1,128], index: 1, kind: input, shape index: {}]
  %s2 = inlined_call_operand.vmem [shape: f32[1,128], index: 2, kind: input, shape index: {}]
  %s3 = inlined_call_operand.hbm [shape: bf16[256,128], index: 3, kind: input, shape index: {}]
  %s4 = inlined_call_operand.hbm [shape: bf16[2,4,32,256], index: 4, kind: output, shape index: {0}]
  %s5 = inlined_call_operand.hbm [shape: bf16[2,4,32,256], index: 5, kind: output, shape index: {1}]
  %6 = xla_tuple %s4, %s5
  %s7 = sld [smem:[#allocation0]]
  $region69: #{tpu_custom_call.1} parent=0
    _
  %s9 = ssub.s32 1, %s7
  %s10 = scalar_select 0, %s9, %s7
  $region1: #{tpu_custom_call.1} parent=0
    #allocation2 [shape = 'u8[131072]{0}', space=vmem, size = 0x20000, scoped, tag = 'input window, operand 0']
    #allocation3 [shape = 's32[2]{0}', space=sflag, size = 0x8, scoped, tag = 'scoped memory for tpu_custom_call.1']
    #allocation4 [shape = 's32[2]{0}', space=sflag, size = 0x8, scoped, tag = 'scoped memory for tpu_custom_call.1']
    #allocation5 [shape = 'u8[512]{0}', space=vmem, size = 0x400, scoped, tag = 'input window, operand 1, single buffered']
    #allocation6 [shape = 's32[1]{0}', space=sflag, size = 0x4, scoped, tag = 'scoped memory for tpu_custom_call.1']
    #allocation7 [shape = 'u8[65536]{0}', space=vmem, size = 0x10000, scoped, tag = 'input window, operand 3, single buffered']
    #allocation8 [shape = 'u8[65536]{0}', space=vmem, size = 0x10000, scoped, tag = 'output window, operand 0']
    #allocation9 [shape = 'u8[65536]{0}', space=vmem, size = 0x10000, scoped, tag = 'output window, operand 1']
    #allocation10 [shape = 's32[2]{0}', space=sflag, size = 0x8, scoped, tag = 'scoped memory for tpu_custom_call.1']
    %11 = vsyncpa [#allocation3], 0
    %s12 = scalar_lea.sflag [#allocation3], 1
    %13 = vsyncpa %s12, 0
    %14 = vsyncpa [#allocation6], 0
    %15 = vsyncpa [#allocation4], 0
    %s16 = scalar_lea.sflag [#allocation4], 1
    %17 = vsyncpa %s16, 0
    %18 = vsyncpa [#allocation10], 0
    %s19 = scalar_lea.sflag [#allocation10], 1
    %20 = vsyncpa %s19, 0
    loop: start=0, step=1, limit=6
    $region2: #{tpu_custom_call.1} parent=1 // loop_pre_header
      _
    $region3: #{tpu_custom_call.1} parent=1 // loop_header
      %s22 = sphi 0, %s26
      %p23 = scmp.ge.s32.totalorder %s22, 6
      %s29 = sphi 0, %s41
      %s30 = sphi 0, %s37
      %s31 = sphi 0, %s29
      %s32 = sphi 0, %s30
      %s33 = sphi 0, %s31
      %s34 = sphi 0, %s32
      %s46 = sphi 0, %s48
      %s49 = sphi 0, %s46
      %s50 = sphi 0, %s49
      %s66 = sphi 0, %s50
      %s70 = sphi 0, %s70
      %s72 = sphi 0, %s70
      %s73 = sphi 0, %s72
      %s87 = sphi 0, %s73
      %s91 = sphi 0, %s91
      %s93 = sphi 0, %s91
      %s94 = sphi 0, %s93
      %s108 = sphi 0, %s94
      %s112 = sphi 0, %s112
      %s114 = sphi 0, %s112
      %s115 = sphi 0, %s114
      %s129 = sphi 0, %s115
      %s137 = sphi 0, %s139
      %s140 = sphi 0, %s137
      %s141 = sphi 0, %s140
      %s157 = sphi 0, %s141
      %s165 = sphi 0, %s167
      %s168 = sphi 0, %s165
      %s169 = sphi 0, %s168
      %s185 = sphi 0, %s169
    $region4: #{tpu_custom_call.1} parent=1 // loop_header_branch
      %25 = sbr.rel (%p23) target = $region8
    $region5: #{tpu_custom_call.1} parent=1 // loop_body
      %s27 = ssub.s32 %s22, 1
      %s28 = ssub.s32 %s22, 2
      %s35 = sadd.s32 1, %s30
      %p36 = scmp.ge.s32.totalorder %s35, 2
      %s37 = scalar_select %p36, 0, %s35
      %s38 = sadd.s32 1, %s29
      %s39 = scalar_select %p36, %s38, %s29
      %p40 = scmp.ge.s32.totalorder %s39, 2
      %s41 = scalar_select %p40, 0, %s39
      %s42 = ssub.s32 %s29, %s41
      %s43 = ssub.s32 %s30, %s37
      %s44 = sor.u32 %s42, %s43
      %p45 = scmp.eq.s32.totalorder %s44, 0
      %s47 = sadd.s32 %s46, 1
      %s48 = scalar_select %p45, %s46, %s47
      %p51 = pneg %p45
      %p52 = scmp.eq.s32.totalorder %s22, 3
      %p53 = por %p51, %p52
      %p54 = scmp.ne.s32.totalorder %s46, %s49
      %p55 = scmp.eq.s32.totalorder %s22, 0
      %p56 = por %p54, %p55
      %p57 = scmp.ne.s32.totalorder %s46, %s49
      %p58 = scmp.eq.s32.totalorder %s27, 3
      %p59 = por %p57, %p58
      %p60 = scmp.ne.s32.totalorder %s49, %s50
      %p61 = scmp.eq.s32.totalorder %s27, 0
      %p62 = por %p60, %p61
      %p63 = scmp.ne.s32.totalorder %s49, %s50
      %p64 = scmp.eq.s32.totalorder %s28, 3
      %p65 = por %p63, %p64
      %p67 = scmp.ne.s32.totalorder %s50, %s66
      %p68 = scmp.eq.s32.totalorder %s28, 0
      %p69 = por %p67, %p68
      %s71 = sadd.s32 %s70, 1
      %p74 = scmp.eq.s32.totalorder %s22, 3
      %p75 = scmp.ne.s32.totalorder %s70, %s72
      %p76 = scmp.eq.s32.totalorder %s22, 0
      %p77 = por %p75, %p76
      %p78 = scmp.ne.s32.totalorder %s70, %s72
      %p79 = scmp.eq.s32.totalorder %s27, 3
      %p80 = por %p78, %p79
      %p81 = scmp.ne.s32.totalorder %s72, %s73
      %p82 = scmp.eq.s32.totalorder %s27, 0
      %p83 = por %p81, %p82
      %p84 = scmp.ne.s32.totalorder %s72, %s73
      %p85 = scmp.eq.s32.totalorder %s28, 3
      %p86 = por %p84, %p85
      %p88 = scmp.ne.s32.totalorder %s73, %s87
      %p89 = scmp.eq.s32.totalorder %s28, 0
      %p90 = por %p88, %p89
      %s92 = sadd.s32 %s91, 1
      %p95 = scmp.eq.s32.totalorder %s22, 3
      %p96 = scmp.ne.s32.totalorder %s91, %s93
      %p97 = scmp.eq.s32.totalorder %s22, 0
      %p98 = por %p96, %p97
      %p99 = scmp.ne.s32.totalorder %s91, %s93
      %p100 = scmp.eq.s32.totalorder %s27, 3
      %p101 = por %p99, %p100
      %p102 = scmp.ne.s32.totalorder %s93, %s94
      %p103 = scmp.eq.s32.totalorder %s27, 0
      %p104 = por %p102, %p103
      %p105 = scmp.ne.s32.totalorder %s93, %s94
      %p106 = scmp.eq.s32.totalorder %s28, 3
      %p107 = por %p105, %p106
      %p109 = scmp.ne.s32.totalorder %s94, %s108
      %p110 = scmp.eq.s32.totalorder %s28, 0
      %p111 = por %p109, %p110
      %s113 = sadd.s32 %s112, 1
      %p116 = scmp.eq.s32.totalorder %s22, 3
      %p117 = scmp.ne.s32.totalorder %s112, %s114
      %p118 = scmp.eq.s32.totalorder %s22, 0
      %p119 = por %p117, %p118
      %p120 = scmp.ne.s32.totalorder %s112, %s114
      %p121 = scmp.eq.s32.totalorder %s27, 3
      %p122 = por %p120, %p121
      %p123 = scmp.ne.s32.totalorder %s114, %s115
      %p124 = scmp.eq.s32.totalorder %s27, 0
      %p125 = por %p123, %p124
      %p126 = scmp.ne.s32.totalorder %s114, %s115
      %p127 = scmp.eq.s32.totalorder %s28, 3
      %p128 = por %p126, %p127
      %p130 = scmp.ne.s32.totalorder %s115, %s129
      %p131 = scmp.eq.s32.totalorder %s28, 0
      %p132 = por %p130, %p131
      %s133 = ssub.s32 %s29, %s41
      %s134 = ssub.s32 %s30, %s37
      %s135 = sor.u32 %s133, %s134
      %p136 = scmp.eq.s32.totalorder %s135, 0
      %s138 = sadd.s32 %s137, 1
      %s139 = scalar_select %p136, %s137, %s138
      %p142 = pneg %p136
      %p143 = scmp.eq.s32.totalorder %s22, 3
      %p144 = por %p142, %p143
      %p145 = scmp.ne.s32.totalorder %s137, %s140
      %p146 = scmp.eq.s32.totalorder %s22, 0
      %p147 = por %p145, %p146
      %p148 = scmp.ne.s32.totalorder %s137, %s140
      %p149 = scmp.eq.s32.totalorder %s27, 3
      %p150 = por %p148, %p149
      %p151 = scmp.ne.s32.totalorder %s140, %s141
      %p152 = scmp.eq.s32.totalorder %s27, 0
      %p153 = por %p151, %p152
      %p154 = scmp.ne.s32.totalorder %s140, %s141
      %p155 = scmp.eq.s32.totalorder %s28, 3
      %p156 = por %p154, %p155
      %p158 = scmp.ne.s32.totalorder %s141, %s157
      %p159 = scmp.eq.s32.totalorder %s28, 0
      %p160 = por %p158, %p159
      %s161 = ssub.s32 %s29, %s41
      %s162 = ssub.s32 %s30, %s37
      %s163 = sor.u32 %s161, %s162
      %p164 = scmp.eq.s32.totalorder %s163, 0
      %s166 = sadd.s32 %s165, 1
      %s167 = scalar_select %p164, %s165, %s166
      %p170 = pneg %p164
      %p171 = scmp.eq.s32.totalorder %s22, 3
      %p172 = por %p170, %p171
      %p173 = scmp.ne.s32.totalorder %s165, %s168
      %p174 = scmp.eq.s32.totalorder %s22, 0
      %p175 = por %p173, %p174
      %p176 = scmp.ne.s32.totalorder %s165, %s168
      %p177 = scmp.eq.s32.totalorder %s27, 3
      %p178 = por %p176, %p177
      %p179 = scmp.ne.s32.totalorder %s168, %s169
      %p180 = scmp.eq.s32.totalorder %s27, 0
      %p181 = por %p179, %p180
      %p182 = scmp.ne.s32.totalorder %s168, %s169
      %p183 = scmp.eq.s32.totalorder %s28, 3
      %p184 = por %p182, %p183
      %p186 = scmp.ne.s32.totalorder %s169, %s185
      %p187 = scmp.eq.s32.totalorder %s28, 0
      %p188 = por %p186, %p187
      %p189 = scmp.le.s32.totalorder 1, %s22
      %p190 = scmp.lt.s32.totalorder %s22, 5
      %p191 = pnand %p189, %p190
      %p192 = pneg %p191
      // Predicated region
      $region9: #{tpu_custom_call.1} parent=5 // pred_check
        _
      $region10: #{tpu_custom_call.1} parent=5 // pred_check_branch
        %194 = sbr.rel (%p191) target = $region12
      $region11: #{tpu_custom_call.1} parent=5 // pred_region
        %s195 = ssub.s32 %s22, 1
        // Predicated region
        $region13: #{tpu_custom_call.1} parent=11 // pred_check
          %p196 = pneg %p83
        $region14: #{tpu_custom_call.1} parent=11 // pred_check_branch
          %198 = sbr.rel (%p196) target = $region16
        $region15: #{tpu_custom_call.1} parent=11 // pred_region
          %200 = vsyncadd [#allocation6], 0
          %s202 = sshll.u32 %s1, 4
          %s203 = int_to_ptr.hbm [resolvable:$true] %s202
          %s204 = sshll.u32 [#allocation5], 4
          %s205 = int_to_ptr.vmem [resolvable:$true] %s204
          %207 = dma.hbm_to_vmem [thread:$0]  %s203, 16, %s205, [#allocation6]
        $region16: #{tpu_custom_call.1} parent=11 // pred_fallthru
          _
        // Predicated region
        $region17: #{tpu_custom_call.1} parent=11 // pred_check
          %p208 = pneg %p104
        $region18: #{tpu_custom_call.1} parent=11 // pred_check_branch
          %210 = sbr.rel (%p208) target = $region20
        $region19: #{tpu_custom_call.1} parent=11 // pred_region
          _
        $region20: #{tpu_custom_call.1} parent=11 // pred_fallthru
          _
        // Predicated region
        $region21: #{tpu_custom_call.1} parent=11 // pred_check
          %p211 = pneg %p125
        $region22: #{tpu_custom_call.1} parent=11 // pred_check_branch
          %213 = sbr.rel (%p211) target = $region24
        $region23: #{tpu_custom_call.1} parent=11 // pred_region
          %215 = vsyncadd [#allocation6], 0
          %s216 = sshll.u32 %s3, 4
          %s217 = int_to_ptr.hbm [resolvable:$true] %s216
          %s218 = sshll.u32 [#allocation7], 4
          %s219 = int_to_ptr.vmem [resolvable:$true] %s218
          %224 = dma.hbm_to_vmem [thread:$0]  %s217, 2048, %s219, [#allocation6], 64, 64, 4
        $region24: #{tpu_custom_call.1} parent=11 // pred_fallthru
          _
      $region12: #{tpu_custom_call.1} parent=5 // pred_fallthru
        _
      %p225 = scmp.lt.s32.totalorder %s22, 4
      // Predicated region
      $region25: #{tpu_custom_call.1} parent=5 // pred_check
        %p226 = pneg %p225
      $region26: #{tpu_custom_call.1} parent=5 // pred_check_branch
        %228 = sbr.rel (%p226) target = $region28
      $region27: #{tpu_custom_call.1} parent=5 // pred_region
        // Predicated region
        $region29: #{tpu_custom_call.1} parent=27 // pred_check
          %p229 = pneg %p56
        $region30: #{tpu_custom_call.1} parent=27 // pred_check_branch
          %231 = sbr.rel (%p229) target = $region32
        $region31: #{tpu_custom_call.1} parent=27 // pred_region
          %s232 = sand.u32 %s46, 1
          %s233 = scalar_lea.sflag [#allocation3], %s232
          %s234 = sand.u32 %s46, 1
          %s235 = smul.addr %s234, 128
          %s236 = scalar_lea.vmem [#allocation2], %s235
          %s237 = smul.u32 16, %s30
          %239 = vsyncadd %s233, 0
          %s240 = smul.addr %s29, 32
          %s241 = sadd.s32 %s237, %s240
          %s242 = smul.addr %s241, 8
          %s243 = scalar_lea.hbm %s0, %s242
          %s244 = sshll.u32 %s243, 4
          %s245 = int_to_ptr.hbm [resolvable:$true] %s244
          %s246 = sshll.u32 %s236, 4
          %s247 = int_to_ptr.vmem [resolvable:$true] %s246
          %252 = dma.hbm_to_vmem [thread:$0]  %s245, 2048, %s247, %s233, 128, 128, 8
        $region32: #{tpu_custom_call.1} parent=27 // pred_fallthru
          _
      $region28: #{tpu_custom_call.1} parent=5 // pred_fallthru
        _
      %p253 = scmp.le.s32.totalorder 1, %s22
      %p254 = scmp.lt.s32.totalorder %s22, 5
      %p255 = pnand %p253, %p254
      %p256 = pneg %p255
      // Predicated region
      $region33: #{tpu_custom_call.1} parent=5 // pred_check
        _
      $region34: #{tpu_custom_call.1} parent=5 // pred_check_branch
        %258 = sbr.rel (%p255) target = $region36
      $region35: #{tpu_custom_call.1} parent=5 // pred_region
        %s259 = ssub.s32 %s22, 1
        %s260 = sand.u32 %s49, 1
        %s261 = scalar_lea.sflag [#allocation3], %s260
        %s262 = sand.u32 %s49, 1
        %s263 = smul.addr %s262, 128
        %s264 = scalar_lea.vmem [#allocation2], %s263
        // Predicated region
        $region37: #{tpu_custom_call.1} parent=35 // pred_check
          %p265 = pneg %p62
        $region38: #{tpu_custom_call.1} parent=35 // pred_check_branch
          %267 = sbr.rel (%p265) target = $region40
        $region39: #{tpu_custom_call.1} parent=35 // pred_region
          %269 = dma.done %s261, 2048
        $region40: #{tpu_custom_call.1} parent=35 // pred_fallthru
          _
        // Predicated region
        $region41: #{tpu_custom_call.1} parent=35 // pred_check
          %p270 = pneg %p83
        $region42: #{tpu_custom_call.1} parent=35 // pred_check_branch
          %272 = sbr.rel (%p270) target = $region44
        $region43: #{tpu_custom_call.1} parent=35 // pred_region
          %274 = dma.done [#allocation6], 16
        $region44: #{tpu_custom_call.1} parent=35 // pred_fallthru
          _
        // Predicated region
        $region45: #{tpu_custom_call.1} parent=35 // pred_check
          %p275 = pneg %p125
        $region46: #{tpu_custom_call.1} parent=35 // pred_check_branch
          %277 = sbr.rel (%p275) target = $region48
        $region47: #{tpu_custom_call.1} parent=35 // pred_region
          %279 = dma.done [#allocation6], 2048
        $region48: #{tpu_custom_call.1} parent=35 // pred_fallthru
          _
        %s280 = sand.u32 %s49, 1
        %s281 = scalar_lea.sflag [#allocation3], %s280
        %s282 = sand.u32 %s49, 1
        %s283 = smul.addr %s282, 128
        %s284 = scalar_lea.vmem [#allocation2], %s283
        %p285 = pneg %p62
        %p286 = pneg %p59
        %p287 = pneg %p83
        %p288 = pneg %p80
        %p289 = pneg %p104
        %p290 = pneg %p101
        %p291 = pneg %p125
        %p292 = pneg %p122
        %p293 = pneg %p153
        %p294 = pneg %p150
        %s295 = sand.u32 %s140, 1
        %s296 = scalar_lea.sflag [#allocation4], %s295
        %s297 = sand.u32 %s140, 1
        %s298 = smul.addr %s297, 64
        %s299 = scalar_lea.vmem [#allocation8], %s298
        %p300 = pneg %p181
        %p301 = pneg %p178
        %s302 = sand.u32 %s168, 1
        %s303 = scalar_lea.sflag [#allocation10], %s302
        %s304 = sand.u32 %s168, 1
        %s305 = smul.addr %s304, 64
        %s306 = scalar_lea.vmem [#allocation9], %s305
        %s307 = smul.u32 16, %s32
        %v308 = vld [vmem:[%s264] sm:$0xff]
        %v309 = vld [vmem:[%s264 + $0x8] sm:$0xff]
        %v310 = vld [vmem:[%s264 + $0x10] sm:$0xff]
        %v311 = vld [vmem:[%s264 + $0x18] sm:$0xff]
        %v312 = vld [vmem:[%s264 + $0x20] sm:$0xff]
        %v313 = vld [vmem:[%s264 + $0x28] sm:$0xff]
        %v314 = vld [vmem:[%s264 + $0x30] sm:$0xff]
        %v315 = vld [vmem:[%s264 + $0x38] sm:$0xff]
        %v316 = vld [vmem:[%s264 + $0x40] sm:$0xff]
        %v317 = vld [vmem:[%s264 + $0x48] sm:$0xff]
        %v318 = vld [vmem:[%s264 + $0x50] sm:$0xff]
        %v319 = vld [vmem:[%s264 + $0x58] sm:$0xff]
        %v320 = vld [vmem:[%s264 + $0x60] sm:$0xff]
        %v321 = vld [vmem:[%s264 + $0x68] sm:$0xff]
        %v322 = vld [vmem:[%s264 + $0x70] sm:$0xff]
        %v323 = vld [vmem:[%s264 + $0x78] sm:$0xff]
        %v324 = vld [vmem:[#allocation5] sm:$0x1]
        %v325 = vld [vmem:[%s2] sm:$0x1]
        %326 = vadd.xlane.f32.xlu0 %v308
        %v327 = vpop.xlane.xlu0 %326
        %328 = vadd.xlane.f32.xlu0 %v309
        %v329 = vpop.xlane.xlu0 %328
        %330 = vadd.xlane.f32.xlu0 %v310
        %v331 = vpop.xlane.xlu0 %330
        %332 = vadd.xlane.f32.xlu0 %v311
        %v333 = vpop.xlane.xlu0 %332
        %334 = vadd.xlane.f32.xlu0 %v312
        %v335 = vpop.xlane.xlu0 %334
        %336 = vadd.xlane.f32.xlu0 %v313
        %v337 = vpop.xlane.xlu0 %336
        %338 = vadd.xlane.f32.xlu0 %v314
        %v339 = vpop.xlane.xlu0 %338
        %340 = vadd.xlane.f32.xlu0 %v315
        %v341 = vpop.xlane.xlu0 %340
        %342 = vadd.xlane.f32.xlu0 %v316
        %v343 = vpop.xlane.xlu0 %342
        %344 = vadd.xlane.f32.xlu0 %v317
        %v345 = vpop.xlane.xlu0 %344
        %346 = vadd.xlane.f32.xlu0 %v318
        %v347 = vpop.xlane.xlu0 %346
        %348 = vadd.xlane.f32.xlu0 %v319
        %v349 = vpop.xlane.xlu0 %348
        %350 = vadd.xlane.f32.xlu0 %v320
        %v351 = vpop.xlane.xlu0 %350
        %352 = vadd.xlane.f32.xlu0 %v321
        %v353 = vpop.xlane.xlu0 %352
        %354 = vadd.xlane.f32.xlu0 %v322
        %v355 = vpop.xlane.xlu0 %354
        %356 = vadd.xlane.f32.xlu0 %v323
        %v357 = vpop.xlane.xlu0 %356
        %v358 = vrcp.pop 128.0
        %v359 = vmul.f32 128.0, %v358
        %v360 = vsub.f32 1.0, %v359
        %v361 = vmul.f32 %v358, %v360
        %v362 = vadd.f32 %v358, %v361
        %vm363 = vweird.f32 %v358
        %v364 = vsel %vm363, %v358, %v362
        %v365 = vmul.f32 %v327, %v364
        %v366 = vmul.f32 %v329, %v364
        %v367 = vmul.f32 %v331, %v364
        %v368 = vmul.f32 %v333, %v364
        %v369 = vmul.f32 %v335, %v364
        %v370 = vmul.f32 %v337, %v364
        %v371 = vmul.f32 %v339, %v364
        %v372 = vmul.f32 %v341, %v364
        %v373 = vmul.f32 %v343, %v364
        %v374 = vmul.f32 %v345, %v364
        %v375 = vmul.f32 %v347, %v364
        %v376 = vmul.f32 %v349, %v364
        %v377 = vmul.f32 %v351, %v364
        %v378 = vmul.f32 %v353, %v364
        %v379 = vmul.f32 %v355, %v364
        %v380 = vmul.f32 %v357, %v364
        %v381 = vsub.f32 %v308, %v365
        %v382 = vsub.f32 %v309, %v366
        %v383 = vsub.f32 %v310, %v367
        %v384 = vsub.f32 %v311, %v368
        %v385 = vsub.f32 %v312, %v369
        %v386 = vsub.f32 %v313, %v370
        %v387 = vsub.f32 %v314, %v371
        %v388 = vsub.f32 %v315, %v372
        %v389 = vsub.f32 %v316, %v373
        %v390 = vsub.f32 %v317, %v374
        %v391 = vsub.f32 %v318, %v375
        %v392 = vsub.f32 %v319, %v376
        %v393 = vsub.f32 %v320, %v377
        %v394 = vsub.f32 %v321, %v378
        %v395 = vsub.f32 %v322, %v379
        %v396 = vsub.f32 %v323, %v380
        %v397 = vmul.f32 %v381, %v381
        %v398 = vmul.f32 %v382, %v382
        %v399 = vmul.f32 %v383, %v383
        %v400 = vmul.f32 %v384, %v384
        %v401 = vmul.f32 %v385, %v385
        %v402 = vmul.f32 %v386, %v386
        %v403 = vmul.f32 %v387, %v387
        %v404 = vmul.f32 %v388, %v388
        %v405 = vmul.f32 %v389, %v389
        %v406 = vmul.f32 %v390, %v390
        %v407 = vmul.f32 %v391, %v391
        %v408 = vmul.f32 %v392, %v392
        %v409 = vmul.f32 %v393, %v393
        %v410 = vmul.f32 %v394, %v394
        %v411 = vmul.f32 %v395, %v395
        %v412 = vmul.f32 %v396, %v396
        %413 = vadd.xlane.f32.xlu0 %v397
        %v414 = vpop.xlane.xlu0 %413
        %415 = vadd.xlane.f32.xlu0 %v398
        %v416 = vpop.xlane.xlu0 %415
        %417 = vadd.xlane.f32.xlu0 %v399
        %v418 = vpop.xlane.xlu0 %417
        %419 = vadd.xlane.f32.xlu0 %v400
        %v420 = vpop.xlane.xlu0 %419
        %421 = vadd.xlane.f32.xlu0 %v401
        %v422 = vpop.xlane.xlu0 %421
        %423 = vadd.xlane.f32.xlu0 %v402
        %v424 = vpop.xlane.xlu0 %423
        %425 = vadd.xlane.f32.xlu0 %v403
        %v426 = vpop.xlane.xlu0 %425
        %427 = vadd.xlane.f32.xlu0 %v404
        %v428 = vpop.xlane.xlu0 %427
        %429 = vadd.xlane.f32.xlu0 %v405
        %v430 = vpop.xlane.xlu0 %429
        %431 = vadd.xlane.f32.xlu0 %v406
        %v432 = vpop.xlane.xlu0 %431
        %433 = vadd.xlane.f32.xlu0 %v407
        %v434 = vpop.xlane.xlu0 %433
        %435 = vadd.xlane.f32.xlu0 %v408
        %v436 = vpop.xlane.xlu0 %435
        %437 = vadd.xlane.f32.xlu0 %v409
        %v438 = vpop.xlane.xlu0 %437
        %439 = vadd.xlane.f32.xlu0 %v410
        %v440 = vpop.xlane.xlu0 %439
        %441 = vadd.xlane.f32.xlu0 %v411
        %v442 = vpop.xlane.xlu0 %441
        %443 = vadd.xlane.f32.xlu0 %v412
        %v444 = vpop.xlane.xlu0 %443
        %v445 = vmul.f32 %v414, %v364
        %v446 = vmul.f32 %v416, %v364
        %v447 = vmul.f32 %v418, %v364
        %v448 = vmul.f32 %v420, %v364
        %v449 = vmul.f32 %v422, %v364
        %v450 = vmul.f32 %v424, %v364
        %v451 = vmul.f32 %v426, %v364
        %v452 = vmul.f32 %v428, %v364
        %v453 = vmul.f32 %v430, %v364
        %v454 = vmul.f32 %v432, %v364
        %v455 = vmul.f32 %v434, %v364
        %v456 = vmul.f32 %v436, %v364
        %v457 = vmul.f32 %v438, %v364
        %v458 = vmul.f32 %v440, %v364
        %v459 = vmul.f32 %v442, %v364
        %v460 = vmul.f32 %v444, %v364
        %v461 = vadd.f32 %v445, 1e-05
        %v462 = vadd.f32 %v446, 1e-05
        %v463 = vadd.f32 %v447, 1e-05
        %v464 = vadd.f32 %v448, 1e-05
        %v465 = vadd.f32 %v449, 1e-05
        %v466 = vadd.f32 %v450, 1e-05
        %v467 = vadd.f32 %v451, 1e-05
        %v468 = vadd.f32 %v452, 1e-05
        %v469 = vadd.f32 %v453, 1e-05
        %v470 = vadd.f32 %v454, 1e-05
        %v471 = vadd.f32 %v455, 1e-05
        %v472 = vadd.f32 %v456, 1e-05
        %v473 = vadd.f32 %v457, 1e-05
        %v474 = vadd.f32 %v458, 1e-05
        %v475 = vadd.f32 %v459, 1e-05
        %v476 = vadd.f32 %v460, 1e-05
        %v477 = vrsqrt.pop %v461
        %v478 = vmul.f32 %v477, %v461
        %v479 = vmul.f32 %v478, %v477
        %v480 = vmul.f32 0.5, %v479
        %v481 = vsub.f32 1.5, %v480
        %v482 = vmul.f32 %v477, %v481
        %vm483 = vweird.f32 %v461
        %vm484 = vweird.f32 %v477
        %vm485 = vmor %vm483, %vm484
        %v486 = vsel %vm485, %v477, %v482
        %v487 = vrsqrt.pop %v462
        %v488 = vmul.f32 %v487, %v462
        %v489 = vmul.f32 %v488, %v487
        %v490 = vmul.f32 0.5, %v489
        %v491 = vsub.f32 1.5, %v490
        %v492 = vmul.f32 %v487, %v491
        %vm493 = vweird.f32 %v462
        %vm494 = vweird.f32 %v487
        %vm495 = vmor %vm493, %vm494
        %v496 = vsel %vm495, %v487, %v492
        %v497 = vrsqrt.pop %v463
        %v498 = vmul.f32 %v497, %v463
        %v499 = vmul.f32 %v498, %v497
        %v500 = vmul.f32 0.5, %v499
        %v501 = vsub.f32 1.5, %v500
        %v502 = vmul.f32 %v497, %v501
        %vm503 = vweird.f32 %v463
        %vm504 = vweird.f32 %v497
        %vm505 = vmor %vm503, %vm504
        %v506 = vsel %vm505, %v497, %v502
        %v507 = vrsqrt.pop %v464
        %v508 = vmul.f32 %v507, %v464
        %v509 = vmul.f32 %v508, %v507
        %v510 = vmul.f32 0.5, %v509
        %v511 = vsub.f32 1.5, %v510
        %v512 = vmul.f32 %v507, %v511
        %vm513 = vweird.f32 %v464
        %vm514 = vweird.f32 %v507
        %vm515 = vmor %vm513, %vm514
        %v516 = vsel %vm515, %v507, %v512
        %v517 = vrsqrt.pop %v465
        %v518 = vmul.f32 %v517, %v465
        %v519 = vmul.f32 %v518, %v517
        %v520 = vmul.f32 0.5, %v519
        %v521 = vsub.f32 1.5, %v520
        %v522 = vmul.f32 %v517, %v521
        %vm523 = vweird.f32 %v465
        %vm524 = vweird.f32 %v517
        %vm525 = vmor %vm523, %vm524
        %v526 = vsel %vm525, %v517, %v522
        %v527 = vrsqrt.pop %v466
        %v528 = vmul.f32 %v527, %v466
        %v529 = vmul.f32 %v528, %v527
        %v530 = vmul.f32 0.5, %v529
        %v531 = vsub.f32 1.5, %v530
        %v532 = vmul.f32 %v527, %v531
        %vm533 = vweird.f32 %v466
        %vm534 = vweird.f32 %v527
        %vm535 = vmor %vm533, %vm534
        %v536 = vsel %vm535, %v527, %v532
        %v537 = vrsqrt.pop %v467
        %v538 = vmul.f32 %v537, %v467
        %v539 = vmul.f32 %v538, %v537
        %v540 = vmul.f32 0.5, %v539
        %v541 = vsub.f32 1.5, %v540
        %v542 = vmul.f32 %v537, %v541
        %vm543 = vweird.f32 %v467
        %vm544 = vweird.f32 %v537
        %vm545 = vmor %vm543, %vm544
        %v546 = vsel %vm545, %v537, %v542
        %v547 = vrsqrt.pop %v468
        %v548 = vmul.f32 %v547, %v468
        %v549 = vmul.f32 %v548, %v547
        %v550 = vmul.f32 0.5, %v549
        %v551 = vsub.f32 1.5, %v550
        %v552 = vmul.f32 %v547, %v551
        %vm553 = vweird.f32 %v468
        %vm554 = vweird.f32 %v547
        %vm555 = vmor %vm553, %vm554
        %v556 = vsel %vm555, %v547, %v552
        %v557 = vrsqrt.pop %v469
        %v558 = vmul.f32 %v557, %v469
        %v559 = vmul.f32 %v558, %v557
        %v560 = vmul.f32 0.5, %v559
        %v561 = vsub.f32 1.5, %v560
        %v562 = vmul.f32 %v557, %v561
        %vm563 = vweird.f32 %v469
        %vm564 = vweird.f32 %v557
        %vm565 = vmor %vm563, %vm564
        %v566 = vsel %vm565, %v557, %v562
        %v567 = vrsqrt.pop %v470
        %v568 = vmul.f32 %v567, %v470
        %v569 = vmul.f32 %v568, %v567
        %v570 = vmul.f32 0.5, %v569
        %v571 = vsub.f32 1.5, %v570
        %v572 = vmul.f32 %v567, %v571
        %vm573 = vweird.f32 %v470
        %vm574 = vweird.f32 %v567
        %vm575 = vmor %vm573, %vm574
        %v576 = vsel %vm575, %v567, %v572
        %v577 = vrsqrt.pop %v471
        %v578 = vmul.f32 %v577, %v471
        %v579 = vmul.f32 %v578, %v577
        %v580 = vmul.f32 0.5, %v579
        %v581 = vsub.f32 1.5, %v580
        %v582 = vmul.f32 %v577, %v581
        %vm583 = vweird.f32 %v471
        %vm584 = vweird.f32 %v577
        %vm585 = vmor %vm583, %vm584
        %v586 = vsel %vm585, %v577, %v582
        %v587 = vrsqrt.pop %v472
        %v588 = vmul.f32 %v587, %v472
        %v589 = vmul.f32 %v588, %v587
        %v590 = vmul.f32 0.5, %v589
        %v591 = vsub.f32 1.5, %v590
        %v592 = vmul.f32 %v587, %v591
        %vm593 = vweird.f32 %v472
        %vm594 = vweird.f32 %v587
        %vm595 = vmor %vm593, %vm594
        %v596 = vsel %vm595, %v587, %v592
        %v597 = vrsqrt.pop %v473
        %v598 = vmul.f32 %v597, %v473
        %v599 = vmul.f32 %v598, %v597
        %v600 = vmul.f32 0.5, %v599
        %v601 = vsub.f32 1.5, %v600
        %v602 = vmul.f32 %v597, %v601
        %vm603 = vweird.f32 %v473
        %vm604 = vweird.f32 %v597
        %vm605 = vmor %vm603, %vm604
        %v606 = vsel %vm605, %v597, %v602
        %v607 = vrsqrt.pop %v474
        %v608 = vmul.f32 %v607, %v474
        %v609 = vmul.f32 %v608, %v607
        %v610 = vmul.f32 0.5, %v609
        %v611 = vsub.f32 1.5, %v610
        %v612 = vmul.f32 %v607, %v611
        %vm613 = vweird.f32 %v474
        %vm614 = vweird.f32 %v607
        %vm615 = vmor %vm613, %vm614
        %v616 = vsel %vm615, %v607, %v612
        %v617 = vrsqrt.pop %v475
        %v618 = vmul.f32 %v617, %v475
        %v619 = vmul.f32 %v618, %v617
        %v620 = vmul.f32 0.5, %v619
        %v621 = vsub.f32 1.5, %v620
        %v622 = vmul.f32 %v617, %v621
        %vm623 = vweird.f32 %v475
        %vm624 = vweird.f32 %v617
        %vm625 = vmor %vm623, %vm624
        %v626 = vsel %vm625, %v617, %v622
        %v627 = vrsqrt.pop %v476
        %v628 = vmul.f32 %v627, %v476
        %v629 = vmul.f32 %v628, %v627
        %v630 = vmul.f32 0.5, %v629
        %v631 = vsub.f32 1.5, %v630
        %v632 = vmul.f32 %v627, %v631
        %vm633 = vweird.f32 %v476
        %vm634 = vweird.f32 %v627
        %vm635 = vmor %vm633, %vm634
        %v636 = vsel %vm635, %v627, %v632
        %v637 = vmul.f32 %v381, %v486
        %v638 = vmul.f32 %v382, %v496
        %v639 = vmul.f32 %v383, %v506
        %v640 = vmul.f32 %v384, %v516
        %v641 = vmul.f32 %v385, %v526
        %v642 = vmul.f32 %v386, %v536
        %v643 = vmul.f32 %v387, %v546
        %v644 = vmul.f32 %v388, %v556
        %v645 = vmul.f32 %v389, %v566
        %v646 = vmul.f32 %v390, %v576
        %v647 = vmul.f32 %v391, %v586
        %v648 = vmul.f32 %v392, %v596
        %v649 = vmul.f32 %v393, %v606
        %v650 = vmul.f32 %v394, %v616
        %v651 = vmul.f32 %v395, %v626
        %v652 = vmul.f32 %v396, %v636
        %v654 = vperm.slane %v324, 0
        %v656 = vmul.f32 %v637, %v654
        %v657 = vmul.f32 %v638, %v654
        %v658 = vmul.f32 %v639, %v654
        %v659 = vmul.f32 %v640, %v654
        %v660 = vmul.f32 %v641, %v654
        %v661 = vmul.f32 %v642, %v654
        %v662 = vmul.f32 %v643, %v654
        %v663 = vmul.f32 %v644, %v654
        %v664 = vmul.f32 %v645, %v654
        %v665 = vmul.f32 %v646, %v654
        %v666 = vmul.f32 %v647, %v654
        %v667 = vmul.f32 %v648, %v654
        %v668 = vmul.f32 %v649, %v654
        %v669 = vmul.f32 %v650, %v654
        %v670 = vmul.f32 %v651, %v654
        %v671 = vmul.f32 %v652, %v654
        %v673 = vperm.slane %v325, 0
        %v675 = vadd.f32 %v656, %v673
        %v676 = vadd.f32 %v657, %v673
        %v677 = vadd.f32 %v658, %v673
        %v678 = vadd.f32 %v659, %v673
        %v679 = vadd.f32 %v660, %v673
        %v680 = vadd.f32 %v661, %v673
        %v681 = vadd.f32 %v662, %v673
        %v682 = vadd.f32 %v663, %v673
        %v683 = vadd.f32 %v664, %v673
        %v684 = vadd.f32 %v665, %v673
        %v685 = vadd.f32 %v666, %v673
        %v686 = vadd.f32 %v667, %v673
        %v687 = vadd.f32 %v668, %v673
        %v688 = vadd.f32 %v669, %v673
        %v689 = vadd.f32 %v670, %v673
        %v690 = vadd.f32 %v671, %v673
        %v691 = vpack.c.bf16 %v676, %v675
        %v692 = vpack.c.bf16 %v678, %v677
        %v693 = vpack.c.bf16 %v680, %v679
        %v694 = vpack.c.bf16 %v682, %v681
        %v695 = vpack.c.bf16 %v684, %v683
        %v696 = vpack.c.bf16 %v686, %v685
        %v697 = vpack.c.bf16 %v688, %v687
        %v698 = vpack.c.bf16 %v690, %v689
        %v699 = vld [vmem:[#allocation7] sm:$0xf]
        %v700 = vld [vmem:[#allocation7 + $0x4] sm:$0xf]
        %v701 = vld [vmem:[#allocation7 + $0x8] sm:$0xf]
        %v702 = vld [vmem:[#allocation7 + $0xc] sm:$0xf]
        %v703 = vld [vmem:[#allocation7 + $0x10] sm:$0xf]
        %v704 = vld [vmem:[#allocation7 + $0x14] sm:$0xf]
        %v705 = vld [vmem:[#allocation7 + $0x18] sm:$0xf]
        %v706 = vld [vmem:[#allocation7 + $0x1c] sm:$0xf]
        %v707 = vld [vmem:[#allocation7 + $0x20] sm:$0xf]
        %v708 = vld [vmem:[#allocation7 + $0x24] sm:$0xf]
        %v709 = vld [vmem:[#allocation7 + $0x28] sm:$0xf]
        %v710 = vld [vmem:[#allocation7 + $0x2c] sm:$0xf]
        %v711 = vld [vmem:[#allocation7 + $0x30] sm:$0xf]
        %v712 = vld [vmem:[#allocation7 + $0x34] sm:$0xf]
        %v713 = vld [vmem:[#allocation7 + $0x38] sm:$0xf]
        %v714 = vld [vmem:[#allocation7 + $0x3c] sm:$0xf]
        %v715 = vld [vmem:[#allocation7 + $0x40] sm:$0xf]
        %v716 = vld [vmem:[#allocation7 + $0x44] sm:$0xf]
        %v717 = vld [vmem:[#allocation7 + $0x48] sm:$0xf]
        %v718 = vld [vmem:[#allocation7 + $0x4c] sm:$0xf]
        %v719 = vld [vmem:[#allocation7 + $0x50] sm:$0xf]
        %v720 = vld [vmem:[#allocation7 + $0x54] sm:$0xf]
        %v721 = vld [vmem:[#allocation7 + $0x58] sm:$0xf]
        %v722 = vld [vmem:[#allocation7 + $0x5c] sm:$0xf]
        %v723 = vld [vmem:[#allocation7 + $0x60] sm:$0xf]
        %v724 = vld [vmem:[#allocation7 + $0x64] sm:$0xf]
        %v725 = vld [vmem:[#allocation7 + $0x68] sm:$0xf]
        %v726 = vld [vmem:[#allocation7 + $0x6c] sm:$0xf]
        %v727 = vld [vmem:[#allocation7 + $0x70] sm:$0xf]
        %v728 = vld [vmem:[#allocation7 + $0x74] sm:$0xf]
        %v729 = vld [vmem:[#allocation7 + $0x78] sm:$0xf]
        %v730 = vld [vmem:[#allocation7 + $0x7c] sm:$0xf]
        %v763 = vunpack.c.l.b16 %v699
        %v764 = vunpack.c.l.b16 %v700
        %v765 = vunpack.c.l.b16 %v701
        %v766 = vunpack.c.l.b16 %v702
        %v767 = vunpack.c.l.b16 %v703
        %v768 = vunpack.c.l.b16 %v704
        %v769 = vunpack.c.l.b16 %v705
        %v770 = vunpack.c.l.b16 %v706
        %v771 = vunpack.c.l.b16 %v707
        %v772 = vunpack.c.l.b16 %v708
        %v773 = vunpack.c.l.b16 %v709
        %v774 = vunpack.c.l.b16 %v710
        %v775 = vunpack.c.l.b16 %v711
        %v776 = vunpack.c.l.b16 %v712
        %v777 = vunpack.c.l.b16 %v713
        %v778 = vunpack.c.l.b16 %v714
        %v779 = vunpack.c.l.b16 %v715
        %v780 = vunpack.c.l.b16 %v716
        %v781 = vunpack.c.l.b16 %v717
        %v782 = vunpack.c.l.b16 %v718
        %v783 = vunpack.c.l.b16 %v719
        %v784 = vunpack.c.l.b16 %v720
        %v785 = vunpack.c.l.b16 %v721
        %v786 = vunpack.c.l.b16 %v722
        %v787 = vunpack.c.l.b16 %v723
        %v788 = vunpack.c.l.b16 %v724
        %v789 = vunpack.c.l.b16 %v725
        %v790 = vunpack.c.l.b16 %v726
        %v791 = vunpack.c.l.b16 %v727
        %v792 = vunpack.c.l.b16 %v728
        %v793 = vunpack.c.l.b16 %v729
        %v794 = vunpack.c.l.b16 %v730
        %v795 = vpack.c.b16 %v764, %v763
        %v796 = vpack.c.b16 %v766, %v765
        %v797 = vpack.c.b16 %v768, %v767
        %v798 = vpack.c.b16 %v770, %v769
        %v799 = vpack.c.b16 %v772, %v771
        %v800 = vpack.c.b16 %v774, %v773
        %v801 = vpack.c.b16 %v776, %v775
        %v802 = vpack.c.b16 %v778, %v777
        %v803 = vpack.c.b16 %v780, %v779
        %v804 = vpack.c.b16 %v782, %v781
        %v805 = vpack.c.b16 %v784, %v783
        %v806 = vpack.c.b16 %v786, %v785
        %v807 = vpack.c.b16 %v788, %v787
        %v808 = vpack.c.b16 %v790, %v789
        %v809 = vpack.c.b16 %v792, %v791
        %v810 = vpack.c.b16 %v794, %v793
        %827 = vmatpush.bf16.xpose.msra.mxu0 %v698
        %828 = vmatpush.bf16.xpose.msra.mxu0 %v697
        %829 = vmatpush.bf16.xpose.msra.mxu0 %v696
        %830 = vmatpush.bf16.xpose.msra.mxu0 %v695
        %831 = vmatpush.bf16.xpose.msra.mxu0 %v694
        %832 = vmatpush.bf16.xpose.msra.mxu0 %v693
        %833 = vmatpush.bf16.xpose.msra.mxu0 %v692
        %834 = vmatpush.bf16.xpose.msra.mxu0 %v691
        %835 = vmatmul.bf16.gmra.mxu0 %v795
        %v836 = vpop.f32.mrf.mxu0
        %v837 = vadd.f32 0.0, %v836
        %v838 = vpop.f32.mrf.mxu0
        %v839 = vadd.f32 0.0, %v838
        %840 = vmatmul.bf16.gmra.mxu0 %v796
        %v841 = vpop.f32.mrf.mxu0
        %v842 = vadd.f32 0.0, %v841
        %v843 = vpop.f32.mrf.mxu0
        %v844 = vadd.f32 0.0, %v843
        %845 = vmatmul.bf16.gmra.mxu0 %v797
        %v846 = vpop.f32.mrf.mxu0
        %v847 = vadd.f32 0.0, %v846
        %v848 = vpop.f32.mrf.mxu0
        %v849 = vadd.f32 0.0, %v848
        %850 = vmatmul.bf16.gmra.mxu0 %v798
        %v851 = vpop.f32.mrf.mxu0
        %v852 = vadd.f32 0.0, %v851
        %v853 = vpop.f32.mrf.mxu0
        %v854 = vadd.f32 0.0, %v853
        %855 = vmatmul.bf16.gmra.mxu0 %v799
        %v856 = vpop.f32.mrf.mxu0
        %v857 = vadd.f32 0.0, %v856
        %v858 = vpop.f32.mrf.mxu0
        %v859 = vadd.f32 0.0, %v858
        %860 = vmatmul.bf16.gmra.mxu0 %v800
        %v861 = vpop.f32.mrf.mxu0
        %v862 = vadd.f32 0.0, %v861
        %v863 = vpop.f32.mrf.mxu0
        %v864 = vadd.f32 0.0, %v863
        %865 = vmatmul.bf16.gmra.mxu0 %v801
        %v866 = vpop.f32.mrf.mxu0
        %v867 = vadd.f32 0.0, %v866
        %v868 = vpop.f32.mrf.mxu0
        %v869 = vadd.f32 0.0, %v868
        %870 = vmatmul.bf16.gmra.mxu0 %v802
        %v871 = vpop.f32.mrf.mxu0
        %v872 = vadd.f32 0.0, %v871
        %v873 = vpop.f32.mrf.mxu0
        %v874 = vadd.f32 0.0, %v873
        %875 = vmatmul.bf16.gmra.mxu0 %v803
        %v876 = vpop.f32.mrf.mxu0
        %v877 = vadd.f32 0.0, %v876
        %v878 = vpop.f32.mrf.mxu0
        %v879 = vadd.f32 0.0, %v878
        %880 = vmatmul.bf16.gmra.mxu0 %v804
        %v881 = vpop.f32.mrf.mxu0
        %v882 = vadd.f32 0.0, %v881
        %v883 = vpop.f32.mrf.mxu0
        %v884 = vadd.f32 0.0, %v883
        %885 = vmatmul.bf16.gmra.mxu0 %v805
        %v886 = vpop.f32.mrf.mxu0
        %v887 = vadd.f32 0.0, %v886
        %v888 = vpop.f32.mrf.mxu0
        %v889 = vadd.f32 0.0, %v888
        %890 = vmatmul.bf16.gmra.mxu0 %v806
        %v891 = vpop.f32.mrf.mxu0
        %v892 = vadd.f32 0.0, %v891
        %v893 = vpop.f32.mrf.mxu0
        %v894 = vadd.f32 0.0, %v893
        %895 = vmatmul.bf16.gmra.mxu0 %v807
        %v896 = vpop.f32.mrf.mxu0
        %v897 = vadd.f32 0.0, %v896
        %v898 = vpop.f32.mrf.mxu0
        %v899 = vadd.f32 0.0, %v898
        %900 = vmatmul.bf16.gmra.mxu0 %v808
        %v901 = vpop.f32.mrf.mxu0
        %v902 = vadd.f32 0.0, %v901
        %v903 = vpop.f32.mrf.mxu0
        %v904 = vadd.f32 0.0, %v903
        %905 = vmatmul.bf16.gmra.mxu0 %v809
        %v906 = vpop.f32.mrf.mxu0
        %v907 = vadd.f32 0.0, %v906
        %v908 = vpop.f32.mrf.mxu0
        %v909 = vadd.f32 0.0, %v908
        %910 = vmatmul.bf16.gmra.mxu0 %v810
        %v911 = vpop.f32.mrf.mxu0
        %v912 = vadd.f32 0.0, %v911
        %v913 = vpop.f32.mrf.mxu0
        %v914 = vadd.f32 0.0, %v913
        %915 = vdwg.mxu0
        %v916 = vpack.c.bf16 %v837, %v837
        %v917 = vpack.c.bf16 %v839, %v839
        %v918 = vpack.c.bf16 %v842, %v842
        %v919 = vpack.c.bf16 %v844, %v844
        %v920 = vpack.c.bf16 %v847, %v847
        %v921 = vpack.c.bf16 %v849, %v849
        %v922 = vpack.c.bf16 %v852, %v852
        %v923 = vpack.c.bf16 %v854, %v854
        %v924 = vpack.c.bf16 %v857, %v857
        %v925 = vpack.c.bf16 %v859, %v859
        %v926 = vpack.c.bf16 %v862, %v862
        %v927 = vpack.c.bf16 %v864, %v864
        %v928 = vpack.c.bf16 %v867, %v867
        %v929 = vpack.c.bf16 %v869, %v869
        %v930 = vpack.c.bf16 %v872, %v872
        %v931 = vpack.c.bf16 %v874, %v874
        %v932 = vpack.c.bf16 %v877, %v877
        %v933 = vpack.c.bf16 %v879, %v879
        %v934 = vpack.c.bf16 %v882, %v882
        %v935 = vpack.c.bf16 %v884, %v884
        %v936 = vpack.c.bf16 %v887, %v887
        %v937 = vpack.c.bf16 %v889, %v889
        %v938 = vpack.c.bf16 %v892, %v892
        %v939 = vpack.c.bf16 %v894, %v894
        %v940 = vpack.c.bf16 %v897, %v897
        %v941 = vpack.c.bf16 %v899, %v899
        %v942 = vpack.c.bf16 %v902, %v902
        %v943 = vpack.c.bf16 %v904, %v904
        %v944 = vpack.c.bf16 %v907, %v907
        %v945 = vpack.c.bf16 %v909, %v909
        %v946 = vpack.c.bf16 %v912, %v912
        %v947 = vpack.c.bf16 %v914, %v914
        %948 = vst [vmem:[%s299] sm:$0xf] %v916
        %949 = vst [vmem:[%s299 + $0x4] sm:$0xf] %v917
        %950 = vst [vmem:[%s299 + $0x8] sm:$0xf] %v918
        %951 = vst [vmem:[%s299 + $0xc] sm:$0xf] %v919
        %952 = vst [vmem:[%s299 + $0x10] sm:$0xf] %v920
        %953 = vst [vmem:[%s299 + $0x14] sm:$0xf] %v921
        %954 = vst [vmem:[%s299 + $0x18] sm:$0xf] %v922
        %955 = vst [vmem:[%s299 + $0x1c] sm:$0xf] %v923
        %956 = vst [vmem:[%s299 + $0x20] sm:$0xf] %v924
        %957 = vst [vmem:[%s299 + $0x24] sm:$0xf] %v925
        %958 = vst [vmem:[%s299 + $0x28] sm:$0xf] %v926
        %959 = vst [vmem:[%s299 + $0x2c] sm:$0xf] %v927
        %960 = vst [vmem:[%s299 + $0x30] sm:$0xf] %v928
        %961 = vst [vmem:[%s299 + $0x34] sm:$0xf] %v929
        %962 = vst [vmem:[%s299 + $0x38] sm:$0xf] %v930
        %963 = vst [vmem:[%s299 + $0x3c] sm:$0xf] %v931
        %964 = vst [vmem:[%s306] sm:$0xf] %v932
        %965 = vst [vmem:[%s306 + $0x4] sm:$0xf] %v933
        %966 = vst [vmem:[%s306 + $0x8] sm:$0xf] %v934
        %967 = vst [vmem:[%s306 + $0xc] sm:$0xf] %v935
        %968 = vst [vmem:[%s306 + $0x10] sm:$0xf] %v936
        %969 = vst [vmem:[%s306 + $0x14] sm:$0xf] %v937
        %970 = vst [vmem:[%s306 + $0x18] sm:$0xf] %v938
        %971 = vst [vmem:[%s306 + $0x1c] sm:$0xf] %v939
        %972 = vst [vmem:[%s306 + $0x20] sm:$0xf] %v940
        %973 = vst [vmem:[%s306 + $0x24] sm:$0xf] %v941
        %974 = vst [vmem:[%s306 + $0x28] sm:$0xf] %v942
        %975 = vst [vmem:[%s306 + $0x2c] sm:$0xf] %v943
        %976 = vst [vmem:[%s306 + $0x30] sm:$0xf] %v944
        %977 = vst [vmem:[%s306 + $0x34] sm:$0xf] %v945
        %978 = vst [vmem:[%s306 + $0x38] sm:$0xf] %v946
        %979 = vst [vmem:[%s306 + $0x3c] sm:$0xf] %v947
        %s980 = sand.u32 %s140, 1
        %s981 = scalar_lea.sflag [#allocation4], %s980
        %s982 = sand.u32 %s140, 1
        %s983 = smul.addr %s982, 64
        %s984 = scalar_lea.vmem [#allocation8], %s983
        %s985 = sand.u32 %s168, 1
        %s986 = scalar_lea.sflag [#allocation10], %s985
        %s987 = sand.u32 %s168, 1
        %s988 = smul.addr %s987, 64
        %s989 = scalar_lea.vmem [#allocation9], %s988
        // Predicated region
        $region49: #{tpu_custom_call.1} parent=35 // pred_check
          %p990 = pneg %p150
        $region50: #{tpu_custom_call.1} parent=35 // pred_check_branch
          %992 = sbr.rel (%p990) target = $region52
        $region51: #{tpu_custom_call.1} parent=35 // pred_region
          %994 = vsyncadd %s981, 0
          %s995 = smul.addr %s31, 32
          %s996 = sadd.s32 %s32, %s995
          %s997 = smul.addr %s996, 4
          %s998 = scalar_lea.hbm %s4, %s997
          %s999 = sshll.u32 %s984, 4
          %s1000 = int_to_ptr.vmem [resolvable:$true] %s999
          %s1001 = sshll.u32 %s998, 4
          %s1002 = int_to_ptr.hbm [resolvable:$true] %s1001
          %1007 = dma.vmem_to_hbm [thread:$0]  %s1000, 1024, %s1002, %s981, 64, 128, 4
        $region52: #{tpu_custom_call.1} parent=35 // pred_fallthru
          _
        // Predicated region
        $region53: #{tpu_custom_call.1} parent=35 // pred_check
          %p1008 = pneg %p178
        $region54: #{tpu_custom_call.1} parent=35 // pred_check_branch
          %1010 = sbr.rel (%p1008) target = $region56
        $region55: #{tpu_custom_call.1} parent=35 // pred_region
          %1012 = vsyncadd %s986, 0
          %s1013 = smul.addr %s31, 32
          %s1014 = sadd.s32 %s32, %s1013
          %s1015 = smul.addr %s1014, 4
          %s1016 = scalar_lea.hbm %s5, %s1015
          %s1017 = sshll.u32 %s989, 4
          %s1018 = int_to_ptr.vmem [resolvable:$true] %s1017
          %s1019 = sshll.u32 %s1016, 4
          %s1020 = int_to_ptr.hbm [resolvable:$true] %s1019
          %1025 = dma.vmem_to_hbm [thread:$0]  %s1018, 1024, %s1020, %s986, 64, 128, 4
        $region56: #{tpu_custom_call.1} parent=35 // pred_fallthru
          _
      $region36: #{tpu_custom_call.1} parent=5 // pred_fallthru
        _
      %p1026 = scmp.le.s32.totalorder 2, %s22
      // Predicated region
      $region57: #{tpu_custom_call.1} parent=5 // pred_check
        %p1027 = pneg %p1026
      $region58: #{tpu_custom_call.1} parent=5 // pred_check_branch
        %1029 = sbr.rel (%p1027) target = $region60
      $region59: #{tpu_custom_call.1} parent=5 // pred_region
        %s1030 = ssub.s32 %s22, 2
        // Predicated region
        $region61: #{tpu_custom_call.1} parent=59 // pred_check
          %p1031 = pneg %p156
        $region62: #{tpu_custom_call.1} parent=59 // pred_check_branch
          %1033 = sbr.rel (%p1031) target = $region64
        $region63: #{tpu_custom_call.1} parent=59 // pred_region
          %s1034 = sand.u32 %s141, 1
          %s1035 = scalar_lea.sflag [#allocation4], %s1034
          %s1036 = sand.u32 %s141, 1
          %s1037 = smul.addr %s1036, 64
          %s1038 = scalar_lea.vmem [#allocation8], %s1037
          %1040 = dma.done %s1035, 1024
        $region64: #{tpu_custom_call.1} parent=59 // pred_fallthru
          _
        // Predicated region
        $region65: #{tpu_custom_call.1} parent=59 // pred_check
          %p1041 = pneg %p184
        $region66: #{tpu_custom_call.1} parent=59 // pred_check_branch
          %1043 = sbr.rel (%p1041) target = $region68
        $region67: #{tpu_custom_call.1} parent=59 // pred_region
          %s1044 = sand.u32 %s169, 1
          %s1045 = scalar_lea.sflag [#allocation10], %s1044
          %s1046 = sand.u32 %s169, 1
          %s1047 = smul.addr %s1046, 64
          %s1048 = scalar_lea.vmem [#allocation9], %s1047
          %1050 = dma.done %s1045, 1024
        $region68: #{tpu_custom_call.1} parent=59 // pred_fallthru
          _
      $region60: #{tpu_custom_call.1} parent=5 // pred_fallthru
        _
    $region6: #{tpu_custom_call.1} parent=1 // loop_footer
      %s26 = sadd.s32 1, %s22
    $region7: #{tpu_custom_call.1} parent=1 // loop_footer_branch
      %21 = sbr.rel target = $region3
    $region8: #{tpu_custom_call.1} parent=1 // loop_exit
      _
    %1051 = vsyncpa [#allocation3], 1
    %s1052 = scalar_lea.sflag [#allocation3], 1
    %1053 = vsyncpa %s1052, 1
    %1054 = vsyncpa [#allocation6], 1
    %1055 = vsyncpa [#allocation4], 1
    %s1056 = scalar_lea.sflag [#allocation4], 1
    %1057 = vsyncpa %s1056, 1
    %1058 = vsyncpa [#allocation10], 1
    %s1059 = scalar_lea.sflag [#allocation10], 1
    %1060 = vsyncpa %s1059, 1

</llo_original>
